<compile_context>
chip_gen: v6e
topology: v6e:2x2x1
jax: 0.10.0
libtpu: 0.0.40
codegen_flags: <defaults>
</compile_context>

<pallas_src>
import functools

import jax
import jax.numpy as jnp
from jax import lax
from jax.experimental import pallas as pl
from jax.experimental.pallas import tpu as pltpu


def _comp_loss_kernel(feat_ref, proto_ref, labels_ref, out_ref, acc_ref, *,
                      batch_size: int, tile_b: int, scale: float):
    i = pl.program_id(0)

    @pl.when(i == 0)
    def _init():
        acc_ref[0] = jnp.float32(0.0)

    # Features stream in (possibly bf16); elementwise/softmax math stays f32.
    feats = feat_ref[...].astype(jnp.float32)                      # (TB, D)
    protos = proto_ref[...]                                        # (C, D) f32, = p_hat / T

    # logits already include the 1/T scale (folded into the prototype table).
    # Contract on D directly (no XLU transpose of the (C, D) operand).
    logits = lax.dot_general(
        feats, protos,
        dimension_numbers=(((1,), (1,)), ((), ())),
        preferred_element_type=jnp.float32)                        # (TB, C)

    # Numerically stable log-softmax pieces (full log_prob never materialized).
    logits_max = jnp.max(logits, axis=1, keepdims=True)            # (TB, 1)
    shifted = logits - logits_max                                  # (TB, C)
    log_denom = jnp.log(jnp.sum(jnp.exp(shifted), axis=1, keepdims=True))  # (TB, 1)

    labels = labels_ref[...]                                       # (TB, 1) int32
    cls_ids = lax.broadcasted_iota(jnp.int32, shifted.shape, 1)    # (TB, C)
    mask = (labels == cls_ids).astype(jnp.float32)                 # one-hot rows

    # mean_log_prob_pos per row = shifted[label] - log_denom (mask is one-hot).
    pos = jnp.sum(mask * shifted, axis=1, keepdims=True) - log_denom  # (TB, 1)

    # Tail guard: zero out rows beyond the true batch size (row-wise ops above mean
    # garbage in padded rows never contaminates valid rows; the select drops them).
    row = i * tile_b + lax.broadcasted_iota(jnp.int32, (tile_b, 1), 0)
    pos = jnp.where(row < batch_size, pos, 0.0)

    acc_ref[0] += jnp.sum(pos)

    @pl.when(i == pl.num_programs(0) - 1)
    def _finalize():
        out_ref[0, 0] = jnp.float32(scale) * acc_ref[0]


def _round_up(x: int, m: int) -> int:
    return ((x + m - 1) // m) * m


def _vmem_limits() -> tuple[int, int]:
    """(tile_budget_bytes, vmem_limit_bytes) derived from the chip's physical VMEM."""
    cap = 64 * 1024 * 1024  # conservative fallback (v7x per-core physical VMEM)
    try:
        info = pltpu.get_tpu_info()
        cap_attr = getattr(info, "vmem_capacity_bytes", None)
        if cap_attr:
            cap = int(cap_attr)
    except Exception:
        pass
    # Budget tiles well inside the scoped limit; leave headroom for compiler scratch.
    tile_budget = min((cap * 3) // 5, 80 * 1024 * 1024)   # ~77 MiB on 128 MiB chips, ~38 MiB on v7x
    vmem_limit = min((cap * 3) // 4, 100 * 1024 * 1024)   # ~96 MiB on 128 MiB chips, ~48 MiB on v7x
    return tile_budget, vmem_limit


def _choose_tile_b(B: int, D: int, n_cls: int, feat_bytes: int,
                   vmem_budget_bytes: int) -> int:
    """Largest batch tile (multiple of 8) whose working set fits the per-chip budget."""
    if B <= 8:
        return max(B, 1)
    b_pad = _round_up(B, 8)
    c_lanes = _round_up(n_cls, 128)          # (TB, C) intermediates lane-pad to 128
    prot = 2 * n_cls * D * 4                 # resident f32 prototype table (2 buffers worst case)

    def fits(tb: int) -> bool:
        feat = 2 * tb * D * feat_bytes       # double-buffered feature stream
        labs = 2 * tb * 128 * 4              # (tb, 1) int32 block lane-pads to 128
        inter = 4 * tb * c_lanes * 4         # logits/shifted/exp/mask live values & spill
        return feat + labs + inter + prot <= vmem_budget_bytes

    for tb in (8192, 4096, 2048, 1024, 512, 256, 128, 64, 32, 16, 8):
        if tb <= b_pad and fits(tb):
            return tb
    return 8


def comp_loss(features, prototypes, labels, domains=None, *,
              temperature: float = 0.07, base_temperature: float = 0.07,
              use_domain: bool = False):
    """JAX/Pallas equivalent of CompLoss(args, ...)(features, prototypes, labels, domains)
    with use_domain=False. `domains` is accepted but unused (as in the default branch)."""
    if use_domain:
        # TODO(synk): domain-aware branch (feature-feature logits + domain masks) not implemented.
        raise NotImplementedError("CompLoss Pallas kernel only implements use_domain=False.")
    del domains

    B, D = features.shape
    n_cls, D2 = prototypes.shape
    assert D == D2
    labels2d = labels.reshape(B, 1).astype(jnp.int32)

    # Keep bf16 features end-to-end in HBM (halves the feature stream); anything else -> f32.
    if features.dtype not in (jnp.dtype(jnp.bfloat16), jnp.dtype(jnp.float32)):
        features = features.astype(jnp.float32)
    feat_bytes = jnp.dtype(features.dtype).itemsize

    # Normalize prototypes and fold the 1/temperature scale in ONCE, wrapper-side, in f32.
    # (F.normalize eps semantics: denom = max(||p||, 1e-12).)
    p = prototypes.astype(jnp.float32)
    ss = jnp.sum(p * p, axis=1, keepdims=True)
    inv_norm = lax.rsqrt(jnp.maximum(ss, 1e-24))
    protos_scaled = p * (inv_norm * (1.0 / float(temperature)))    # (C, D) f32

    tile_budget, vmem_limit = _vmem_limits()
    tb = _choose_tile_b(B, D, n_cls, feat_bytes, tile_budget)
    grid = (pl.cdiv(B, tb),)

    kernel = functools.partial(
        _comp_loss_kernel,
        batch_size=B, tile_b=tb,
        scale=-(float(temperature) / float(base_temperature)) / float(B))

    out = pl.pallas_call(
        kernel,
        out_shape=jax.ShapeDtypeStruct((1, 1), jnp.float32),
        grid_spec=pltpu.PrefetchScalarGridSpec(
            num_scalar_prefetch=0,
            grid=grid,
            in_specs=[
                pl.BlockSpec((tb, D), lambda i: (i, 0)),         # features tile (streamed)
                pl.BlockSpec((n_cls, D), lambda i: (0, 0)),      # normalized*1/T protos (resident)
                pl.BlockSpec((tb, 1), lambda i: (i, 0)),         # labels tile
            ],
            out_specs=pl.BlockSpec(memory_space=pltpu.SMEM),     # (1,1) scalar result
            scratch_shapes=[
                pltpu.SMEM((1,), jnp.float32),                   # running sum
            ],
        ),
        compiler_params=pltpu.CompilerParams(
            dimension_semantics=("arbitrary",),
            vmem_limit_bytes=int(vmem_limit)),
    )(features, protos_scaled, labels2d)
    return out[0, 0]


def _reference(features, prototypes, labels, temperature=0.07, base_temperature=0.07):
    """Pure-JAX reference mirroring the PyTorch forward (use_domain=False)."""
    protos = prototypes / jnp.maximum(
        jnp.linalg.norm(prototypes, axis=1, keepdims=True), 1e-12)
    n_cls = prototypes.shape[0]
    mask = (labels.reshape(-1, 1) == jnp.arange(n_cls).reshape(1, -1)).astype(jnp.float32)
    fdp = (features.astype(jnp.float32) @ protos.T) / temperature
    lmax = jnp.max(fdp, axis=1, keepdims=True)
    logits = fdp - lmax
    log_prob = logits - jnp.log(jnp.sum(jnp.exp(logits), axis=1, keepdims=True))
    mean_log_prob_pos = jnp.sum(mask * log_prob, axis=1)
    return -(temperature / base_temperature) * jnp.mean(mean_log_prob_pos)


if __name__ == "__main__":
    key = jax.random.PRNGKey(0)
    k1, k2, k3 = jax.random.split(key, 3)

    # B chosen so the grid has >1 step AND a ragged tail tile (exercises both the
    # cross-step accumulation and the validity masking).
    B, D, n_cls = 20, 32, 4
    features = jax.random.normal(k1, (B, D), dtype=jnp.float32)
    features = features / jnp.linalg.norm(features, axis=1, keepdims=True)
    prototypes = jax.random.normal(k2, (n_cls, D), dtype=jnp.float32)
    labels = jax.random.randint(k3, (B,), 0, n_cls, dtype=jnp.int32)
    domains = jnp.zeros((B,), dtype=jnp.int32)  # unused in the default branch

    loss = comp_loss(features, prototypes, labels, domains)
    loss = jax.block_until_ready(loss)

    ref = _reference(features, prototypes, labels)
    assert jnp.allclose(loss, ref, rtol=1e-4, atol=1e-4), (loss, ref)

    print("KERNEL_OK")
</pallas_src>

<mosaic_0001>
module attributes {stable_mosaic.version = 11 : i64} {
  func.func @_comp_loss_kernel(%arg0: i32, %arg1: memref<16x32xf32, #tpu.memory_space<vmem>>, %arg2: memref<4x32xf32, #tpu.memory_space<vmem>>, %arg3: memref<16x1xi32, #tpu.memory_space<vmem>>, %arg4: memref<1x1xf32, #tpu.memory_space<smem>>, %arg5: memref<1xf32, #tpu.memory_space<smem>>) attributes {dimension_semantics = [#tpu.dimension_semantics<arbitrary>], iteration_bounds = array<i64: 2>, scalar_prefetch = 0 : i64, scratch_operands = 1 : i64, tpu.core_type = #tpu.core_type<tc>, window_params = [{transform_indices = @transform_0, window_bounds = array<i64: 16, 32>}, {pipeline_mode = #tpu.pipeline_mode<synchronous>, transform_indices = @transform_1, window_bounds = array<i64: 4, 32>}, {transform_indices = @transform_2, window_bounds = array<i64: 16, 1>}, {transform_indices = @transform_3, window_bounds = array<i64: 1, 1>}]} {
    %c0_i32 = arith.constant 0 : i32
    %0 = arith.cmpi eq, %arg0, %c0_i32 : i32
    %1 = arith.extui %0 : i1 to i32
    %c0_i32_0 = arith.constant 0 : i32
    %2 = arith.cmpi ne, %1, %c0_i32_0 : i32
    scf.if %2 {
      %cst_14 = arith.constant 0.000000e+00 : f32
      %c0_15 = arith.constant 0 : index
      %42 = memref.load %arg5[%c0_15] : memref<1xf32, #tpu.memory_space<smem>>
      memref.store %cst_14, %arg5[%c0_15] : memref<1xf32, #tpu.memory_space<smem>>
    } else {
    }
    %c0 = arith.constant 0 : index
    %c0_1 = arith.constant 0 : index
    %3 = vector.load %arg1[%c0, %c0_1] : memref<16x32xf32, #tpu.memory_space<vmem>>, vector<16x32xf32>
    %c0_2 = arith.constant 0 : index
    %c0_3 = arith.constant 0 : index
    %4 = vector.load %arg2[%c0_2, %c0_3] : memref<4x32xf32, #tpu.memory_space<vmem>>, vector<4x32xf32>
    %cst = arith.constant dense<0.000000e+00> : vector<16x4xf32>
    %5 = tpu.matmul %3, %4, %cst {dimension_numbers = #tpu.dot_dimension_numbers<[1], [1], [0], [0], [0, 0, 1, 0], [], []>} : vector<16x32xf32>, vector<4x32xf32>, vector<16x4xf32> -> vector<16x4xf32>
    %cst_4 = arith.constant dense<0xFF800000> : vector<16xf32>
    %6 = vector.multi_reduction <maximumf>, %5, %cst_4 [1] : vector<16x4xf32> to vector<16xf32>
    %7 = vector.shape_cast %6 : vector<16xf32> to vector<16x1xf32>
    %8 = vector.broadcast %7 : vector<16x1xf32> to vector<16x4xf32>
    %9 = arith.subf %5, %8 : vector<16x4xf32>
    %10 = math.exp %9 : vector<16x4xf32>
    %cst_5 = arith.constant dense<0.000000e+00> : vector<16xf32>
    %11 = vector.multi_reduction <add>, %10, %cst_5 [1] : vector<16x4xf32> to vector<16xf32>
    %12 = vector.shape_cast %11 : vector<16xf32> to vector<16x1xf32>
    %13 = math.log %12 : vector<16x1xf32>
    %c0_6 = arith.constant 0 : index
    %c0_7 = arith.constant 0 : index
    %14 = vector.load %arg3[%c0_6, %c0_7] : memref<16x1xi32, #tpu.memory_space<vmem>>, vector<16x1xi32>
    %15 = tpu.iota {dimensions = array<i32: 1>} : vector<16x4xi32>
    %16 = vector.broadcast %14 : vector<16x1xi32> to vector<16x4xi32>
    %17 = arith.cmpi eq, %16, %15 : vector<16x4xi32>
    %18 = arith.extui %17 : vector<16x4xi1> to vector<16x4xi32>
    %19 = arith.sitofp %18 : vector<16x4xi32> to vector<16x4xf32>
    %20 = arith.mulf %19, %9 : vector<16x4xf32>
    %cst_8 = arith.constant dense<0.000000e+00> : vector<16xf32>
    %21 = vector.multi_reduction <add>, %20, %cst_8 [1] : vector<16x4xf32> to vector<16xf32>
    %22 = vector.shape_cast %21 : vector<16xf32> to vector<16x1xf32>
    %23 = arith.subf %22, %13 : vector<16x1xf32>
    %c16_i32 = arith.constant 16 : i32
    %24 = arith.muli %arg0, %c16_i32 : i32
    %25 = tpu.iota {dimensions = array<i32: 0>} : vector<16x1xi32>
    %26 = vector.broadcast %24 : i32 to vector<16x1xi32>
    %27 = arith.addi %26, %25 : vector<16x1xi32>
    %c20_i32 = arith.constant 20 : i32
    %28 = vector.broadcast %c20_i32 : i32 to vector<16x1xi32>
    %29 = arith.cmpi slt, %27, %28 : vector<16x1xi32>
    %cst_9 = arith.constant 0.000000e+00 : f32
    %30 = vector.broadcast %cst_9 : f32 to vector<16x1xf32>
    %31 = arith.select %29, %23, %30 : vector<16x1xi1>, vector<16x1xf32>
    %c0_10 = arith.constant 0 : index
    %32 = memref.load %arg5[%c0_10] : memref<1xf32, #tpu.memory_space<smem>>
    %33 = vector.shape_cast %31 : vector<16x1xf32> to vector<1x16x1xf32>
    %cst_11 = arith.constant dense<0.000000e+00> : vector<1xf32>
    %34 = vector.multi_reduction <add>, %33, %cst_11 [1, 2] : vector<1x16x1xf32> to vector<1xf32>
    %35 = vector.shape_cast %34 : vector<1xf32> to vector<1x1x1xf32>
    %36 = vector.extract %35[0, 0, 0] : f32 from vector<1x1x1xf32>
    %37 = arith.addf %32, %36 : f32
    %c0_12 = arith.constant 0 : index
    %38 = memref.load %arg5[%c0_12] : memref<1xf32, #tpu.memory_space<smem>>
    memref.store %37, %arg5[%c0_12] : memref<1xf32, #tpu.memory_space<smem>>
    %c1_i32 = arith.constant 1 : i32
    %39 = arith.cmpi eq, %arg0, %c1_i32 : i32
    %40 = arith.extui %39 : i1 to i32
    %c0_i32_13 = arith.constant 0 : i32
    %41 = arith.cmpi ne, %40, %c0_i32_13 : i32
    scf.if %41 {
      %c0_14 = arith.constant 0 : index
      %42 = memref.load %arg5[%c0_14] : memref<1xf32, #tpu.memory_space<smem>>
      %cst_15 = arith.constant -5.000000e-02 : f32
      %43 = arith.mulf %cst_15, %42 : f32
      %c0_16 = arith.constant 0 : index
      %c0_17 = arith.constant 0 : index
      %44 = memref.load %arg4[%c0_16, %c0_17] : memref<1x1xf32, #tpu.memory_space<smem>>
      memref.store %43, %arg4[%c0_16, %c0_17] : memref<1x1xf32, #tpu.memory_space<smem>>
    } else {
    }
    return
  }
  func.func @transform_0(%arg0: i32) -> (i32, i32) {
    %c0_i32 = arith.constant 0 : i32
    %c0_i32_0 = arith.constant 0 : i32
    return %arg0, %c0_i32 : i32, i32
  }
  func.func @transform_1(%arg0: i32) -> (i32, i32) {
    %c0_i32 = arith.constant 0 : i32
    %c0_i32_0 = arith.constant 0 : i32
    %c0_i32_1 = arith.constant 0 : i32
    return %c0_i32, %c0_i32_0 : i32, i32
  }
  func.func @transform_2(%arg0: i32) -> (i32, i32) {
    %c0_i32 = arith.constant 0 : i32
    %c0_i32_0 = arith.constant 0 : i32
    return %arg0, %c0_i32 : i32, i32
  }
  func.func @transform_3(%arg0: i32) -> (i32, i32) {
    %c0_i32 = arith.constant 0 : i32
    %c0_i32_0 = arith.constant 0 : i32
    %c0_i32_1 = arith.constant 0 : i32
    return %c0_i32, %c0_i32_0 : i32, i32
  }
}

</mosaic_0001>

<llo_original>
// kernel: tpu_custom_call.1
$region0: #{tpu_custom_call.1}
  #allocation0 [shape = 'u32[]', space=smem, size = 0x4, offset = 0x4, fixed_abs, tag = 'smem constant byte address 0x4 - core index']
  #allocation1 [shape = 'u32[144,128]{1,0:T(1,128)}', space=vmem, size = 0x12000, scoped, tag = 'internal scratch']
  #allocation2 [shape = 'f32[1]{0:T(128)}', space=smem, size = 0x200, scoped, tag = 'scratch operand']
  %s0 = inlined_call_operand.vmem [shape: f32[20,32], index: 0, kind: input, shape index: {}]
  %s1 = inlined_call_operand.hbm [shape: f32[4,32], index: 1, kind: input, shape index: {}]
  %s2 = inlined_call_operand.vmem [shape: s32[20,1], index: 2, kind: input, shape index: {}]
  %s3 = inlined_call_operand.hbm [shape: f32[1,1], index: 3, kind: output, shape index: {}]
  %s4 = sld [smem:[#allocation0]]
  $region57: #{tpu_custom_call.1} parent=0
    _
  %s6 = ssub.s32 1, %s4
  %s7 = scalar_select 0, %s6, %s4
  $region1: #{tpu_custom_call.1} parent=0
    #allocation3 [shape = 'u8[2048]{0}', space=vmem, size = 0x800, scoped, tag = 'input window, operand 1, single buffered']
    #allocation4 [shape = 's32[2]{0}', space=sflag, size = 0x8, scoped, tag = 'scoped memory for tpu_custom_call.1']
    #allocation5 [shape = 's32[2]{0}', space=sflag, size = 0x8, scoped, tag = 'scoped memory for tpu_custom_call.1']
    #allocation6 [shape = 'u8[512]{0}', space=smem, size = 0x200, scoped, tag = 'output window, operand 0, single buffered']
    %8 = vsyncpa [#allocation4], 0
    %9 = vsyncpa [#allocation5], 0
    loop: start=0, step=1, limit=4
    $region2: #{tpu_custom_call.1} parent=1 // loop_pre_header
      _
    $region3: #{tpu_custom_call.1} parent=1 // loop_header
      %s11 = sphi 0, %s15
      %p12 = scmp.ge.s32.totalorder %s11, 4
      %s21 = sphi 0, %s23
      %s24 = sphi 0, %s21
      %s25 = sphi 0, %s24
      %s41 = sphi 0, %s25
      %s45 = sphi 0, %s45
      %s47 = sphi 0, %s45
      %s48 = sphi 0, %s47
      %s62 = sphi 0, %s48
      %s68 = sphi 0, %s70
      %s71 = sphi 0, %s68
      %s72 = sphi 0, %s71
      %s88 = sphi 0, %s72
      %s92 = sphi 0, %s92
      %s94 = sphi 0, %s92
      %s95 = sphi 0, %s94
      %s109 = sphi 0, %s95
    $region4: #{tpu_custom_call.1} parent=1 // loop_header_branch
      %14 = sbr.rel (%p12) target = $region8
    $region5: #{tpu_custom_call.1} parent=1 // loop_body
      %s16 = ssub.s32 %s11, 1
      %s17 = ssub.s32 %s11, 2
      %s18 = sadd.s32 %s11, 1
      %s19 = ssub.s32 %s11, %s18
      %p20 = scmp.eq.s32.totalorder %s19, 0
      %s22 = sadd.s32 %s21, 1
      %s23 = scalar_select %p20, %s21, %s22
      %p26 = pneg %p20
      %p27 = scmp.eq.s32.totalorder %s11, 1
      %p28 = por %p26, %p27
      %p29 = scmp.ne.s32.totalorder %s21, %s24
      %p30 = scmp.eq.s32.totalorder %s11, 0
      %p31 = por %p29, %p30
      %p32 = scmp.ne.s32.totalorder %s21, %s24
      %p33 = scmp.eq.s32.totalorder %s16, 1
      %p34 = por %p32, %p33
      %p35 = scmp.ne.s32.totalorder %s24, %s25
      %p36 = scmp.eq.s32.totalorder %s16, 0
      %p37 = por %p35, %p36
      %p38 = scmp.ne.s32.totalorder %s24, %s25
      %p39 = scmp.eq.s32.totalorder %s17, 1
      %p40 = por %p38, %p39
      %p42 = scmp.ne.s32.totalorder %s25, %s41
      %p43 = scmp.eq.s32.totalorder %s17, 0
      %p44 = por %p42, %p43
      %s46 = sadd.s32 %s45, 1
      %p49 = scmp.eq.s32.totalorder %s11, 1
      %p50 = scmp.ne.s32.totalorder %s45, %s47
      %p51 = scmp.eq.s32.totalorder %s11, 0
      %p52 = por %p50, %p51
      %p53 = scmp.ne.s32.totalorder %s45, %s47
      %p54 = scmp.eq.s32.totalorder %s16, 1
      %p55 = por %p53, %p54
      %p56 = scmp.ne.s32.totalorder %s47, %s48
      %p57 = scmp.eq.s32.totalorder %s16, 0
      %p58 = por %p56, %p57
      %p59 = scmp.ne.s32.totalorder %s47, %s48
      %p60 = scmp.eq.s32.totalorder %s17, 1
      %p61 = por %p59, %p60
      %p63 = scmp.ne.s32.totalorder %s48, %s62
      %p64 = scmp.eq.s32.totalorder %s17, 0
      %p65 = por %p63, %p64
      %s66 = ssub.s32 %s11, %s18
      %p67 = scmp.eq.s32.totalorder %s66, 0
      %s69 = sadd.s32 %s68, 1
      %s70 = scalar_select %p67, %s68, %s69
      %p73 = pneg %p67
      %p74 = scmp.eq.s32.totalorder %s11, 1
      %p75 = por %p73, %p74
      %p76 = scmp.ne.s32.totalorder %s68, %s71
      %p77 = scmp.eq.s32.totalorder %s11, 0
      %p78 = por %p76, %p77
      %p79 = scmp.ne.s32.totalorder %s68, %s71
      %p80 = scmp.eq.s32.totalorder %s16, 1
      %p81 = por %p79, %p80
      %p82 = scmp.ne.s32.totalorder %s71, %s72
      %p83 = scmp.eq.s32.totalorder %s16, 0
      %p84 = por %p82, %p83
      %p85 = scmp.ne.s32.totalorder %s71, %s72
      %p86 = scmp.eq.s32.totalorder %s17, 1
      %p87 = por %p85, %p86
      %p89 = scmp.ne.s32.totalorder %s72, %s88
      %p90 = scmp.eq.s32.totalorder %s17, 0
      %p91 = por %p89, %p90
      %s93 = sadd.s32 %s92, 1
      %p96 = scmp.eq.s32.totalorder %s11, 1
      %p97 = scmp.ne.s32.totalorder %s92, %s94
      %p98 = scmp.eq.s32.totalorder %s11, 0
      %p99 = por %p97, %p98
      %p100 = scmp.ne.s32.totalorder %s92, %s94
      %p101 = scmp.eq.s32.totalorder %s16, 1
      %p102 = por %p100, %p101
      %p103 = scmp.ne.s32.totalorder %s94, %s95
      %p104 = scmp.eq.s32.totalorder %s16, 0
      %p105 = por %p103, %p104
      %p106 = scmp.ne.s32.totalorder %s94, %s95
      %p107 = scmp.eq.s32.totalorder %s17, 1
      %p108 = por %p106, %p107
      %p110 = scmp.ne.s32.totalorder %s95, %s109
      %p111 = scmp.eq.s32.totalorder %s17, 0
      %p112 = por %p110, %p111
      %p113 = scmp.le.s32.totalorder 1, %s11
      %p114 = scmp.lt.s32.totalorder %s11, 3
      %p115 = pnand %p113, %p114
      %p116 = pneg %p115
      // Predicated region
      $region9: #{tpu_custom_call.1} parent=5 // pred_check
        _
      $region10: #{tpu_custom_call.1} parent=5 // pred_check_branch
        %118 = sbr.rel (%p115) target = $region12
      $region11: #{tpu_custom_call.1} parent=5 // pred_region
        %s119 = ssub.s32 %s11, 1
        // Predicated region
        $region13: #{tpu_custom_call.1} parent=11 // pred_check
          %p120 = pneg %p58
        $region14: #{tpu_custom_call.1} parent=11 // pred_check_branch
          %122 = sbr.rel (%p120) target = $region16
        $region15: #{tpu_custom_call.1} parent=11 // pred_region
          %s124 = ssub.s32 64, 64
          %125 = vsyncadd [#allocation4], %s124
          %s127 = sshll.u32 [#allocation3], 4
          %s128 = int_to_ptr.vmem [resolvable:$true] %s127
          %130 = dma.hbm_to_vmem [thread:$0]  %s1, 64, %s128, [#allocation4]
        $region16: #{tpu_custom_call.1} parent=11 // pred_fallthru
          _
      $region12: #{tpu_custom_call.1} parent=5 // pred_fallthru
        _
      %p131 = scmp.lt.s32.totalorder %s11, 2
      // Predicated region
      $region17: #{tpu_custom_call.1} parent=5 // pred_check
        %p132 = pneg %p131
      $region18: #{tpu_custom_call.1} parent=5 // pred_check_branch
        %134 = sbr.rel (%p132) target = $region20
      $region19: #{tpu_custom_call.1} parent=5 // pred_region
        // Predicated region
        $region21: #{tpu_custom_call.1} parent=19 // pred_check
          %p135 = pneg %p31
        $region22: #{tpu_custom_call.1} parent=19 // pred_check_branch
          %137 = sbr.rel (%p135) target = $region24
        $region23: #{tpu_custom_call.1} parent=19 // pred_region
          %s138 = smul.u32 2, %s11
          %s139 = ssub.s32 3, %s138
          %p140 = scmp.lt.s32.totalorder %s139, 2
          %s141 = scalar_select %p140, %s139, 2
          %s142 = smul.u32 128, %s141
          %p143 = scmp.lt.s32.totalorder %s138, 2
          %s144 = scalar_select %p143, %s138, 2
          %s145 = smul.addr %s144, 8
          %s146 = scalar_lea.vmem %s0, %s145
          %s147 = smul.u32 2, %s11
          %s148 = ssub.s32 3, %s147
          %p149 = scmp.lt.s32.totalorder %s148, 2
          %s150 = scalar_select %p149, %s148, 2
          %s151 = smul.u32 128, %s150
        $region24: #{tpu_custom_call.1} parent=19 // pred_fallthru
          _
        // Predicated region
        $region25: #{tpu_custom_call.1} parent=19 // pred_check
          %p152 = pneg %p78
        $region26: #{tpu_custom_call.1} parent=19 // pred_check_branch
          %154 = sbr.rel (%p152) target = $region28
        $region27: #{tpu_custom_call.1} parent=19 // pred_region
          %s155 = smul.u32 2, %s11
          %s156 = ssub.s32 3, %s155
          %p157 = scmp.lt.s32.totalorder %s156, 2
          %s158 = scalar_select %p157, %s156, 2
          %s159 = smul.u32 128, %s158
          %p160 = scmp.lt.s32.totalorder %s155, 2
          %s161 = scalar_select %p160, %s155, 2
          %s162 = smul.addr %s161, 8
          %s163 = scalar_lea.vmem %s2, %s162
          %s164 = smul.u32 2, %s11
          %s165 = ssub.s32 3, %s164
          %p166 = scmp.lt.s32.totalorder %s165, 2
          %s167 = scalar_select %p166, %s165, 2
          %s168 = smul.u32 128, %s167
        $region28: #{tpu_custom_call.1} parent=19 // pred_fallthru
          _
      $region20: #{tpu_custom_call.1} parent=5 // pred_fallthru
        _
      %p169 = scmp.le.s32.totalorder 1, %s11
      %p170 = scmp.lt.s32.totalorder %s11, 3
      %p171 = pnand %p169, %p170
      %p172 = pneg %p171
      // Predicated region
      $region29: #{tpu_custom_call.1} parent=5 // pred_check
        _
      $region30: #{tpu_custom_call.1} parent=5 // pred_check_branch
        %174 = sbr.rel (%p171) target = $region32
      $region31: #{tpu_custom_call.1} parent=5 // pred_region
        %s175 = ssub.s32 %s11, 1
        // Predicated region
        $region33: #{tpu_custom_call.1} parent=31 // pred_check
          %p176 = pneg %p58
        $region34: #{tpu_custom_call.1} parent=31 // pred_check_branch
          %178 = sbr.rel (%p176) target = $region36
        $region35: #{tpu_custom_call.1} parent=31 // pred_region
          %179 = dma.done [#allocation4], 64
        $region36: #{tpu_custom_call.1} parent=31 // pred_fallthru
          _
        %s180 = smul.u32 2, %s16
        %s181 = ssub.s32 3, %s180
        %p182 = scmp.lt.s32.totalorder %s181, 2
        %s183 = scalar_select %p182, %s181, 2
        %s184 = smul.u32 128, %s183
        %p185 = scmp.lt.s32.totalorder %s180, 2
        %s186 = scalar_select %p185, %s180, 2
        %s187 = smul.addr %s186, 8
        %s188 = scalar_lea.vmem %s0, %s187
        %p189 = pneg %p37
        %p190 = pneg %p34
        %p191 = pneg %p58
        %p192 = pneg %p55
        %s193 = smul.u32 2, %s16
        %s194 = ssub.s32 3, %s193
        %p195 = scmp.lt.s32.totalorder %s194, 2
        %s196 = scalar_select %p195, %s194, 2
        %s197 = smul.u32 128, %s196
        %p198 = scmp.lt.s32.totalorder %s193, 2
        %s199 = scalar_select %p198, %s193, 2
        %s200 = smul.addr %s199, 8
        %s201 = scalar_lea.vmem %s2, %s200
        %p202 = pneg %p84
        %p203 = pneg %p81
        %p204 = pneg %p105
        %p205 = pneg %p102
        %s206 = smul.u32 2, %s16
        %s207 = ssub.s32 3, %s206
        %p208 = scmp.lt.s32.totalorder %s207, 2
        %s209 = scalar_select %p208, %s207, 2
        %s210 = smul.u32 128, %s209
        %p211 = scmp.lt.s32.totalorder %s206, 2
        %s212 = scalar_select %p211, %s206, 2
        %s213 = smul.addr %s212, 8
        %s214 = scalar_lea.vmem %s0, %s213
        %s215 = smul.u32 2, %s16
        %s216 = ssub.s32 3, %s215
        %p217 = scmp.lt.s32.totalorder %s216, 2
        %s218 = scalar_select %p217, %s216, 2
        %s219 = smul.u32 128, %s218
        %s220 = smul.u32 2, %s16
        %s221 = ssub.s32 3, %s220
        %p222 = scmp.lt.s32.totalorder %s221, 2
        %s223 = scalar_select %p222, %s221, 2
        %s224 = smul.u32 128, %s223
        %p225 = scmp.lt.s32.totalorder %s220, 2
        %s226 = scalar_select %p225, %s220, 2
        %s227 = smul.addr %s226, 8
        %s228 = scalar_lea.vmem %s2, %s227
        %s229 = smul.u32 2, %s16
        %s230 = ssub.s32 3, %s229
        %p231 = scmp.lt.s32.totalorder %s230, 2
        %s232 = scalar_select %p231, %s230, 2
        %s233 = smul.u32 128, %s232
        %p234 = scmp.eq.s32.totalorder %s16, 0
        // Predicated region
        $region37: #{tpu_custom_call.1} parent=31 // pred_check
          %p235 = pneg %p234
        $region38: #{tpu_custom_call.1} parent=31 // pred_check_branch
          %237 = sbr.rel (%p235) target = $region40
        $region39: #{tpu_custom_call.1} parent=31 // pred_region
          %s238 = scalar_lea.smem [#allocation2], 0
          %239 = sst [smem:[%s238]] 0.0
        $region40: #{tpu_custom_call.1} parent=31 // pred_fallthru
          _
        %v240 = vld [vmem:[%s214] sm:$0xff]
        %v241 = vld [vmem:[%s214 + $0x8] sm:$0xff]
        %v242 = vld [vmem:[#allocation3] sm:$0xf]
        %vm243 = vcmask 261120
        %v245 = vsel %vm243, %v240, 0
        %v248 = vsel %vm243, %v241, 0
        %v251 = vsel %vm243, %v242, 0
        %253 = vmatprep.subr.mxu0 0.0
        %254 = vmatpush1.xpose.msra.mxu0 0.0
        %255 = vmatprep.subr.mxu0 0.0
        %256 = vmatpush1.xpose.msra.mxu0 0.0
        %257 = vmatprep.subr.mxu0 0.0
        %258 = vmatpush1.xpose.msra.mxu0 0.0
        %259 = vmatprep.subr.mxu0 0.0
        %260 = vmatpush1.xpose.msra.mxu0 0.0
        %261 = vmatprep.subr.mxu0 0.0
        %262 = vmatpush1.xpose.msra.mxu0 0.0
        %263 = vmatprep.subr.mxu0 0.0
        %264 = vmatpush1.xpose.msra.mxu0 0.0
        %265 = vmatprep.subr.mxu0 0.0
        %266 = vmatpush1.xpose.msra.mxu0 0.0
        %267 = vmatprep.subr.mxu0 0.0
        %268 = vmatpush1.xpose.msra.mxu0 0.0
        %269 = vmatprep.subr.mxu0 0.0
        %270 = vmatpush1.xpose.msra.mxu0 0.0
        %271 = vmatprep.subr.mxu0 0.0
        %272 = vmatpush1.xpose.msra.mxu0 0.0
        %273 = vmatprep.subr.mxu0 0.0
        %274 = vmatpush1.xpose.msra.mxu0 0.0
        %275 = vmatprep.subr.mxu0 0.0
        %276 = vmatpush1.xpose.msra.mxu0 0.0
        %277 = vmatprep.subr.mxu0 0.0
        %278 = vmatpush1.xpose.msra.mxu0 0.0
        %279 = vmatprep.subr.mxu0 0.0
        %280 = vmatpush1.xpose.msra.mxu0 0.0
        %281 = vmatprep.subr.mxu0 0.0
        %282 = vmatpush1.xpose.msra.mxu0 0.0
        %283 = vmatprep.subr.mxu0 0.0
        %284 = vmatpush1.xpose.msra.mxu0 %v251
        %285 = vmatprep.subr.mxu0 0.0
        %286 = vmatpush2.xpose.msra.mxu0 0.0
        %287 = vmatprep.subr.mxu0 0.0
        %288 = vmatpush2.xpose.msra.mxu0 0.0
        %289 = vmatprep.subr.mxu0 0.0
        %290 = vmatpush2.xpose.msra.mxu0 0.0
        %291 = vmatprep.subr.mxu0 0.0
        %292 = vmatpush2.xpose.msra.mxu0 0.0
        %293 = vmatprep.subr.mxu0 0.0
        %294 = vmatpush2.xpose.msra.mxu0 0.0
        %295 = vmatprep.subr.mxu0 0.0
        %296 = vmatpush2.xpose.msra.mxu0 0.0
        %297 = vmatprep.subr.mxu0 0.0
        %298 = vmatpush2.xpose.msra.mxu0 0.0
        %299 = vmatprep.subr.mxu0 0.0
        %300 = vmatpush2.xpose.msra.mxu0 0.0
        %301 = vmatprep.subr.mxu0 0.0
        %302 = vmatpush2.xpose.msra.mxu0 0.0
        %303 = vmatprep.subr.mxu0 0.0
        %304 = vmatpush2.xpose.msra.mxu0 0.0
        %305 = vmatprep.subr.mxu0 0.0
        %306 = vmatpush2.xpose.msra.mxu0 0.0
        %307 = vmatprep.subr.mxu0 0.0
        %308 = vmatpush2.xpose.msra.mxu0 0.0
        %309 = vmatprep.subr.mxu0 0.0
        %310 = vmatpush2.xpose.msra.mxu0 0.0
        %311 = vmatprep.subr.mxu0 0.0
        %312 = vmatpush2.xpose.msra.mxu0 0.0
        %313 = vmatprep.subr.mxu0 0.0
        %314 = vmatpush2.xpose.msra.mxu0 0.0
        %315 = vmatprep.subr.mxu0 0.0
        %316 = vmatpush2.xpose.msra.mxu0 0.0
        %317 = vmatprep.mubr.f32.mxu0 0.0
        %318 = vmatmul.mubr.f32.gmra.mxu0 %v245
        %v319 = vpop.f32.mrf.mxu0
        %v320 = vadd.f32 0.0, %v319
        %v321 = vpop.f32.mrf.mxu0
        %322 = vmatprep.mubr.f32.mxu0 0.0
        %323 = vmatmul.mubr.f32.gmra.mxu0 %v248
        %v324 = vpop.f32.mrf.mxu0
        %v325 = vadd.f32 0.0, %v324
        %v326 = vpop.f32.mrf.mxu0
        %327 = vdwg.mxu0
        %vm328 = vcmask 31744
        %v329 = vsel %vm328, %v320, -inf
        %330 = vmax.xlane.f32.xlu0 %v329
        %v331 = vpop.xlane.xlu0 %330
        %v332 = vsel %vm328, %v325, -inf
        %333 = vmax.xlane.f32.xlu0 %v332
        %v334 = vpop.xlane.xlu0 %333
        %v335 = vsub.f32 %v320, %v331
        %v336 = vsub.f32 %v325, %v334
        %v337 = vmul.f32 %v335, 1.442695
        %v338 = vpow.pop %v337
        %v339 = vmul.f32 %v336, 1.442695
        %v340 = vpow.pop %v339
        %v341 = vsel %vm328, %v338, 0.0
        %342 = vadd.xlane.f32.xlu0 %v341
        %v343 = vpop.xlane.xlu0 %342
        %v344 = vsel %vm328, %v340, 0.0
        %345 = vadd.xlane.f32.xlu0 %v344
        %v346 = vpop.xlane.xlu0 %345
        %v347 = vlog2.pop %v343
        %v348 = vmul.f32 %v347, 0.6931472
        %v349 = vlog2.pop %v346
        %v350 = vmul.f32 %v349, 0.6931472
        %v351 = vld [vmem:[%s228] sm:$0xff]
        %v352 = vld [vmem:[%s228 + $0x8] sm:$0xff]
        %v353 = vlaneseq
        %v354 = vand.u32 %v353, 127
        %355 = vset.pattern.permute.xlu0 0
        %356 = vperm.xlu0 %355, %v351
        %v357 = vpop.permute.xlu0 %356
        %358 = vset.pattern.permute.xlu0 0
        %359 = vperm.xlu0 %358, %v352
        %v360 = vpop.permute.xlu0 %359
        %vm361 = vcmp.eq.s32.totalorder %v357, %v354
        %vm362 = vcmp.eq.s32.totalorder %v360, %v354
        %v363 = vsel %vm361, 1, 0
        %v364 = vsel %vm362, 1, 0
        %v365 = vcvt.s32.f32 %v363
        %v366 = vcvt.s32.f32 %v364
        %v367 = vmul.f32 %v365, %v335
        %v368 = vmul.f32 %v366, %v336
        %v369 = vsel %vm328, %v367, 0.0
        %370 = vadd.xlane.f32.xlu0 %v369
        %v371 = vpop.xlane.xlu0 %370
        %v372 = vsel %vm328, %v368, 0.0
        %373 = vadd.xlane.f32.xlu0 %v372
        %v374 = vpop.xlane.xlu0 %373
        %v375 = vsub.f32 %v371, %v348
        %v376 = vsub.f32 %v374, %v350
        %s377 = smul.u32 %s16, 16
        %v378 = vlaneseq
        %v379 = vshrl.u32 %v378, 7
        %v380 = vadd.s32 %v379, 8
        %v381 = vstv %s377
        %v382 = vadd.s32 %v381, %v379
        %v383 = vadd.s32 %v381, %v380
        %vm384 = vcmp.lt.s32.totalorder %v382, 20
        %vm385 = vcmp.lt.s32.totalorder %v383, 20
        %v386 = vsel %vm384, %v375, 0.0
        %v387 = vsel %vm385, %v376, 0.0
        %s388 = sld [smem:[#allocation2]]
        %vm389 = vcmask 7168
        %v390 = vsel %vm389, %v386, 0.0
        %v391 = vsel %vm389, %v387, 0.0
        %v392 = vadd.f32 %v390, %v391
        %393 = vadd.xlane.f32.xlu0 %v392
        %v394 = vpop.xlane.xlu0 %393
        %v395 = vrot.slane %v394, 4
        %v396 = vadd.f32 %v394, %v395
        %v397 = vrot.slane %v396, 2
        %v398 = vadd.f32 %v396, %v397
        %v399 = vrot.slane %v398, 1
        %v400 = vadd.f32 %v398, %v399
        %s401 = vtos %v400
        %s402 = sadd.f32 %s388, %s401
        %s403 = scalar_lea.smem [#allocation2], 0
        %404 = sst [smem:[%s403]] %s402
        %p405 = scmp.eq.s32.totalorder %s16, 1
        // Predicated region
        $region41: #{tpu_custom_call.1} parent=31 // pred_check
          %p406 = pneg %p405
        $region42: #{tpu_custom_call.1} parent=31 // pred_check_branch
          %408 = sbr.rel (%p406) target = $region44
        $region43: #{tpu_custom_call.1} parent=31 // pred_region
          %s409 = sld [smem:[#allocation2]]
          %s410 = smul.f32 %s409, -0.05
          %s411 = scalar_lea.smem [#allocation6], 0
          %412 = sst [smem:[%s411]] %s410
        $region44: #{tpu_custom_call.1} parent=31 // pred_fallthru
          _
        // Predicated region
        $region45: #{tpu_custom_call.1} parent=31 // pred_check
          %p413 = pneg %p102
        $region46: #{tpu_custom_call.1} parent=31 // pred_check_branch
          %415 = sbr.rel (%p413) target = $region48
        $region47: #{tpu_custom_call.1} parent=31 // pred_region
          %s417 = ssub.s32 16, 16
          %418 = vsyncadd [#allocation5], %s417
          %421 = dma.smem_to_hbm [#allocation6], 16, %s3, [#allocation5]
        $region48: #{tpu_custom_call.1} parent=31 // pred_fallthru
          _
        // Predicated region
        $region49: #{tpu_custom_call.1} parent=31 // pred_check
          %p422 = pneg %p102
        $region50: #{tpu_custom_call.1} parent=31 // pred_check_branch
          %424 = sbr.rel (%p422) target = $region52
        $region51: #{tpu_custom_call.1} parent=31 // pred_region
          %425 = dma.done [#allocation5], 16
        $region52: #{tpu_custom_call.1} parent=31 // pred_fallthru
          _
        %426 = sfence
      $region32: #{tpu_custom_call.1} parent=5 // pred_fallthru
        _
      %p427 = scmp.le.s32.totalorder 2, %s11
      // Predicated region
      $region53: #{tpu_custom_call.1} parent=5 // pred_check
        %p428 = pneg %p427
      $region54: #{tpu_custom_call.1} parent=5 // pred_check_branch
        %430 = sbr.rel (%p428) target = $region56
      $region55: #{tpu_custom_call.1} parent=5 // pred_region
        %s431 = ssub.s32 %s11, 2
      $region56: #{tpu_custom_call.1} parent=5 // pred_fallthru
        _
    $region6: #{tpu_custom_call.1} parent=1 // loop_footer
      %s15 = sadd.s32 1, %s11
    $region7: #{tpu_custom_call.1} parent=1 // loop_footer_branch
      %10 = sbr.rel target = $region3
    $region8: #{tpu_custom_call.1} parent=1 // loop_exit
      _
    %432 = vsyncpa [#allocation4], 1
    %s433 = scalar_lea.sflag [#allocation4], 1
    %434 = vsyncpa %s433, 1
    %435 = vsyncpa [#allocation5], 1
    %s436 = scalar_lea.sflag [#allocation5], 1
    %437 = vsyncpa %s436, 1

</llo_original>
